<compile_context>
chip_gen: v6e
topology: v6e:2x2x1
jax: 0.10.0
libtpu: 0.0.40
codegen_flags: <defaults>
</compile_context>

<pallas_src>
import functools

import jax
import jax.numpy as jnp
from jax.experimental import pallas as pl
from jax.experimental.pallas import tpu as pltpu


def _pick_q_tile(seq_len, target=256):
    """Largest q-tile <= target that divides seq_len and satisfies the (8,128)
    sublane rule (multiple of 8, or the full sequence length)."""
    if seq_len <= target:
        return seq_len
    for t in range(target, 7, -1):
        if seq_len % t == 0 and t % 8 == 0:
            return t
    return seq_len


def ori_attention_kernel(q_ref, kv_ref, mq_ref, mk_ref, o_ref, *, inv_scale):
    """One (batch, head, q-tile) grid step.

    q_ref  : [1, 1, tq, dh]  query rows of this head
    kv_ref : [1, 1, S,  dh]  all keys/values of this head (q == k == v)
    mq_ref : [1, tq, 1]      validity mask of the query rows
    mk_ref : [1, 1,  S]      validity mask of the keys (transposed layout)
    o_ref  : [1, 1, tq, dh]
    """
    # bf16 operands for both MXU dots, f32 accumulation.  Fold the 1/dh**0.25
    # scale into the small q operand (O(tq*dh)) instead of the [tq, S] scores.
    q = (q_ref[0, 0].astype(jnp.float32) * inv_scale).astype(jnp.bfloat16)
    kv = kv_ref[0, 0].astype(jnp.bfloat16)                       # [S, dh]

    # scores = q @ k^T   (trans-rhs dot_general -> MXU, f32 accumulate)
    s = jax.lax.dot_general(
        q, kv, (((1,), (1,)), ((), ())),
        preferred_element_type=jnp.float32)                      # [tq, S]

    # torch: (mask @ mask^T).bool() outer-product validity; masked_fill -1e7
    valid = (mq_ref[0].astype(jnp.float32)
             * mk_ref[0].astype(jnp.float32)) != 0.0             # [tq, S]
    s = jnp.where(valid, s, -1e7)

    # Softmax statistics stay f32 (v5e-safe).  Normalization is deferred past
    # the P @ V matmul: per-row EUP reciprocal + [tq, dh] multiply instead of
    # an S^2 per-element divide.
    s_max = jnp.max(s, axis=-1, keepdims=True)
    p = jnp.exp(s - s_max)                                       # [tq, S] f32
    row_sum = jnp.sum(p, axis=-1, keepdims=True)                 # [tq, 1]

    out = jnp.dot(p.astype(jnp.bfloat16), kv,
                  preferred_element_type=jnp.float32)            # [tq, dh]
    out = out * pl.reciprocal(row_sum, approx=True)
    o_ref[0, 0] = out.astype(o_ref.dtype)


def ori_attention_forward(x, mask, *, num_heads, q_tile=None):
    """x: [B, S, D] float32, mask: [B, S, 1] of 0/1.  Returns [B, S, D]."""
    B, S, D = x.shape
    assert D % num_heads == 0
    dh = D // num_heads
    inv_scale = 1.0 / (float(dh) ** 0.25)        # torch: / k.size(-1) ** 0.25

    tq = q_tile if q_tile is not None else _pick_q_tile(S)
    assert S % tq == 0
    nq = S // tq

    # Wrapper-side layout plumbing (outside the kernel): split heads so the
    # kernel sees contiguous [S, dh] head slabs, and provide the mask in both
    # orientations so the kernel never transposes a [S, 1] slab.
    x_h = jnp.swapaxes(x.reshape(B, S, num_heads, dh), 1, 2)     # [B, H, S, dh]
    mask_t = jnp.swapaxes(mask, 1, 2)                            # [B, 1, S]

    kernel = functools.partial(ori_attention_kernel, inv_scale=inv_scale)

    flops = 4 * B * num_heads * S * S * dh                       # q@k^T and P@V
    transcendentals = B * num_heads * (S * S + S)                # exp + recip
    bytes_accessed = 2 * B * S * D * 4 + 2 * B * S * 4           # x in/out + masks

    out_h = pl.pallas_call(
        kernel,
        out_shape=jax.ShapeDtypeStruct((B, num_heads, S, dh), x.dtype),
        grid=(B, num_heads, nq),
        in_specs=[
            pl.BlockSpec((1, 1, tq, dh), lambda b, h, qi: (b, h, qi, 0)),
            pl.BlockSpec((1, 1, S, dh), lambda b, h, qi: (b, h, 0, 0)),
            pl.BlockSpec((1, tq, 1), lambda b, h, qi: (b, qi, 0)),
            pl.BlockSpec((1, 1, S), lambda b, h, qi: (b, 0, 0)),
        ],
        out_specs=pl.BlockSpec((1, 1, tq, dh), lambda b, h, qi: (b, h, qi, 0)),
        compiler_params=pltpu.CompilerParams(
            dimension_semantics=("parallel", "parallel", "parallel")),
        cost_estimate=pl.CostEstimate(
            flops=flops,
            transcendentals=transcendentals,
            bytes_accessed=bytes_accessed),
    )(x_h, x_h, mask, mask_t)

    # merge_last: [B, H, S, dh] -> [B, S, D]
    return jnp.swapaxes(out_h, 1, 2).reshape(B, S, D)


def reference_forward(x, mask, *, num_heads):
    """Pure-JAX transliteration of the PyTorch OriAttention.forward."""
    B, S, D = x.shape
    dh = D // num_heads
    hp = jax.lax.Precision.HIGHEST

    q = x.reshape(B, S, num_heads, dh).transpose(0, 2, 1, 3)     # [B,H,S,dh]
    k = q
    v = q
    scores = jnp.matmul(q, jnp.swapaxes(k, 2, 3), precision=hp) / (dh ** 0.25)
    m2 = jnp.matmul(mask.astype(jnp.float32),
                    jnp.swapaxes(mask, 1, 2).astype(jnp.float32),
                    precision=hp) != 0                           # [B,S,S]
    m2 = jnp.broadcast_to(m2[:, None, :, :], scores.shape)       # repeat over heads
    scores = jnp.where(m2, scores, -1e7)
    scores = jax.nn.softmax(scores, axis=2)                      # torch dim=2
    scores = jnp.swapaxes(scores, 2, 3)                          # [B,H,Sk,Sq]
    out = jnp.matmul(scores, v, precision=hp)                    # [B,H,Sk,dh]
    out = jnp.swapaxes(out, 1, 2).reshape(B, S, D)               # merge_last
    return out


if __name__ == "__main__":
    # Small shapes consistent with the module: batch=2, seq=8, model dim=32, 4 heads.
    B, S, D, H = 2, 8, 32, 4

    key = jax.random.PRNGKey(0)
    kx, _ = jax.random.split(key)
    x = jax.random.normal(kx, (B, S, D), jnp.float32)
    # Valid-length padding mask in the layout the torch code expects: [B, S, 1].
    lengths = jnp.array([6, 8], jnp.int32)
    mask = (jnp.arange(S)[None, :] < lengths[:, None]).astype(jnp.float32)[:, :, None]

    # TODO(synk): nn.Dropout is defined in __init__ but never used in forward(),
    # so no dropout is applied here either.
    out = ori_attention_forward(x, mask, num_heads=H)
    out = jax.block_until_ready(out)

    ref = reference_forward(x, mask, num_heads=H)
    assert out.shape == (B, S, D)
    # bf16 MXU operands + approx reciprocal vs. HIGHEST-precision f32 reference:
    # tolerance widened accordingly (f32 accumulation keeps errors small).
    assert jnp.allclose(out, ref, atol=5e-2, rtol=5e-2)

    print("KERNEL_OK")
</pallas_src>

<mosaic_0001>
module attributes {stable_mosaic.version = 11 : i64} {
  func.func @ori_attention_kernel(%arg0: i32, %arg1: i32, %arg2: i32, %arg3: memref<1x1x8x8xf32, #tpu.memory_space<vmem>>, %arg4: memref<1x1x8x8xf32, #tpu.memory_space<vmem>>, %arg5: memref<1x8x1xf32, #tpu.memory_space<vmem>>, %arg6: memref<1x1x8xf32, #tpu.memory_space<vmem>>, %arg7: memref<1x1x8x8xf32, #tpu.memory_space<vmem>>) attributes {dimension_semantics = [#tpu.dimension_semantics<parallel>, #tpu.dimension_semantics<parallel>, #tpu.dimension_semantics<parallel>], iteration_bounds = array<i64: 2, 4, 1>, scalar_prefetch = 0 : i64, scratch_operands = 0 : i64, tpu.core_type = #tpu.core_type<tc>, window_params = [{transform_indices = @transform_0, window_bounds = array<i64: 1, 1, 8, 8>}, {transform_indices = @transform_1, window_bounds = array<i64: 1, 1, 8, 8>}, {transform_indices = @transform_2, window_bounds = array<i64: 1, 8, 1>}, {transform_indices = @transform_3, window_bounds = array<i64: 1, 1, 8>}, {transform_indices = @transform_4, window_bounds = array<i64: 1, 1, 8, 8>}]} {
    %c0 = arith.constant 0 : index
    %c0_0 = arith.constant 0 : index
    %c0_1 = arith.constant 0 : index
    %c0_2 = arith.constant 0 : index
    %0 = vector.load %arg3[%c0, %c0_0, %c0_1, %c0_2] : memref<1x1x8x8xf32, #tpu.memory_space<vmem>>, vector<1x1x8x8xf32>
    %1 = vector.shape_cast %0 : vector<1x1x8x8xf32> to vector<8x8xf32>
    %cst = arith.constant 0.594603539 : f32
    %2 = vector.broadcast %cst : f32 to vector<8x8xf32>
    %3 = arith.mulf %1, %2 : vector<8x8xf32>
    %4 = arith.truncf %3 : vector<8x8xf32> to vector<8x8xbf16>
    %c0_3 = arith.constant 0 : index
    %c0_4 = arith.constant 0 : index
    %c0_5 = arith.constant 0 : index
    %c0_6 = arith.constant 0 : index
    %5 = vector.load %arg4[%c0_3, %c0_4, %c0_5, %c0_6] : memref<1x1x8x8xf32, #tpu.memory_space<vmem>>, vector<1x1x8x8xf32>
    %6 = vector.shape_cast %5 : vector<1x1x8x8xf32> to vector<8x8xf32>
    %7 = arith.truncf %6 : vector<8x8xf32> to vector<8x8xbf16>
    %cst_7 = arith.constant dense<0.000000e+00> : vector<8x8xf32>
    %8 = tpu.matmul %4, %7, %cst_7 {dimension_numbers = #tpu.dot_dimension_numbers<[1], [1], [0], [0], [0, 0, 1, 0], [], []>} : vector<8x8xbf16>, vector<8x8xbf16>, vector<8x8xf32> -> vector<8x8xf32>
    %c0_8 = arith.constant 0 : index
    %c0_9 = arith.constant 0 : index
    %c0_10 = arith.constant 0 : index
    %9 = vector.load %arg5[%c0_8, %c0_9, %c0_10] : memref<1x8x1xf32, #tpu.memory_space<vmem>>, vector<1x8x1xf32>
    %10 = vector.shape_cast %9 : vector<1x8x1xf32> to vector<8x1xf32>
    %c0_11 = arith.constant 0 : index
    %c0_12 = arith.constant 0 : index
    %c0_13 = arith.constant 0 : index
    %11 = vector.load %arg6[%c0_11, %c0_12, %c0_13] : memref<1x1x8xf32, #tpu.memory_space<vmem>>, vector<1x1x8xf32>
    %12 = vector.shape_cast %11 : vector<1x1x8xf32> to vector<1x8xf32>
    %13 = vector.broadcast %10 : vector<8x1xf32> to vector<8x8xf32>
    %14 = vector.broadcast %12 : vector<1x8xf32> to vector<8x8xf32>
    %15 = arith.mulf %13, %14 : vector<8x8xf32>
    %cst_14 = arith.constant 0.000000e+00 : f32
    %16 = vector.broadcast %cst_14 : f32 to vector<8x8xf32>
    %17 = arith.cmpf one, %15, %16 : vector<8x8xf32>
    %cst_15 = arith.constant -1.000000e+07 : f32
    %18 = vector.broadcast %cst_15 : f32 to vector<8x8xf32>
    %19 = arith.select %17, %8, %18 : vector<8x8xi1>, vector<8x8xf32>
    %cst_16 = arith.constant dense<0xFF800000> : vector<8xf32>
    %20 = vector.multi_reduction <maximumf>, %19, %cst_16 [1] : vector<8x8xf32> to vector<8xf32>
    %21 = vector.shape_cast %20 : vector<8xf32> to vector<8x1xf32>
    %22 = vector.broadcast %21 : vector<8x1xf32> to vector<8x8xf32>
    %23 = arith.subf %19, %22 : vector<8x8xf32>
    %24 = math.exp %23 : vector<8x8xf32>
    %cst_17 = arith.constant dense<0.000000e+00> : vector<8xf32>
    %25 = vector.multi_reduction <add>, %24, %cst_17 [1] : vector<8x8xf32> to vector<8xf32>
    %26 = vector.shape_cast %25 : vector<8xf32> to vector<8x1xf32>
    %27 = arith.truncf %24 : vector<8x8xf32> to vector<8x8xbf16>
    %cst_18 = arith.constant dense<0.000000e+00> : vector<8x8xf32>
    %28 = tpu.matmul %27, %7, %cst_18 {dimension_numbers = #tpu.dot_dimension_numbers<[1], [0], [0], [1], [0, 0, 1, 1], [], []>} : vector<8x8xbf16>, vector<8x8xbf16>, vector<8x8xf32> -> vector<8x8xf32>
    %29 = tpu.reciprocal %26 {approx = true} : vector<8x1xf32> -> vector<8x1xf32>
    %30 = vector.broadcast %29 : vector<8x1xf32> to vector<8x8xf32>
    %31 = arith.mulf %28, %30 : vector<8x8xf32>
    %c0_19 = arith.constant 0 : index
    %c0_20 = arith.constant 0 : index
    %c0_21 = arith.constant 0 : index
    %c0_22 = arith.constant 0 : index
    %32 = vector.load %arg7[%c0_19, %c0_20, %c0_21, %c0_22] : memref<1x1x8x8xf32, #tpu.memory_space<vmem>>, vector<1x1x8x8xf32>
    %33 = vector.shape_cast %32 : vector<1x1x8x8xf32> to vector<8x8xf32>
    %34 = vector.shape_cast %31 : vector<8x8xf32> to vector<1x1x8x8xf32>
    tpu.vector_store %arg7[%c0_19, %c0_20, %c0_21, %c0_22], %34 {strides = array<i32>} : memref<1x1x8x8xf32, #tpu.memory_space<vmem>>, vector<1x1x8x8xf32>,
    return
  }
  func.func @transform_0(%arg0: i32, %arg1: i32, %arg2: i32) -> (i32, i32, i32, i32) {
    %c0_i32 = arith.constant 0 : i32
    %c0_i32_0 = arith.constant 0 : i32
    return %arg0, %arg1, %arg2, %c0_i32 : i32, i32, i32, i32
  }
  func.func @transform_1(%arg0: i32, %arg1: i32, %arg2: i32) -> (i32, i32, i32, i32) {
    %c0_i32 = arith.constant 0 : i32
    %c0_i32_0 = arith.constant 0 : i32
    %c0_i32_1 = arith.constant 0 : i32
    return %arg0, %arg1, %c0_i32, %c0_i32_0 : i32, i32, i32, i32
  }
  func.func @transform_2(%arg0: i32, %arg1: i32, %arg2: i32) -> (i32, i32, i32) {
    %c0_i32 = arith.constant 0 : i32
    %c0_i32_0 = arith.constant 0 : i32
    return %arg0, %arg2, %c0_i32 : i32, i32, i32
  }
  func.func @transform_3(%arg0: i32, %arg1: i32, %arg2: i32) -> (i32, i32, i32) {
    %c0_i32 = arith.constant 0 : i32
    %c0_i32_0 = arith.constant 0 : i32
    %c0_i32_1 = arith.constant 0 : i32
    return %arg0, %c0_i32, %c0_i32_0 : i32, i32, i32
  }
  func.func @transform_4(%arg0: i32, %arg1: i32, %arg2: i32) -> (i32, i32, i32, i32) {
    %c0_i32 = arith.constant 0 : i32
    %c0_i32_0 = arith.constant 0 : i32
    return %arg0, %arg1, %arg2, %c0_i32 : i32, i32, i32, i32
  }
}

</mosaic_0001>

<llo_original>
// kernel: tpu_custom_call.1
$region0: #{tpu_custom_call.1}
  #allocation0 [shape = 'u32[]', space=smem, size = 0x4, offset = 0x4, fixed_abs, tag = 'smem constant byte address 0x4 - core index']
  #allocation1 [shape = 'u32[144,128]{1,0:T(1,128)}', space=vmem, size = 0x12000, scoped, tag = 'internal scratch']
  %s0 = inlined_call_operand.hbm [shape: f32[2,4,8,8], index: 0, kind: input, shape index: {}]
  %s1 = inlined_call_operand.hbm [shape: f32[2,4,8,8], index: 1, kind: input, shape index: {}]
  %s2 = inlined_call_operand.vmem [shape: f32[2,8,1], index: 2, kind: input, shape index: {}]
  %s3 = inlined_call_operand.vmem [shape: f32[2,1,8], index: 3, kind: input, shape index: {}]
  %s4 = inlined_call_operand.hbm [shape: f32[2,4,8,8], index: 4, kind: output, shape index: {}]
  %s5 = sld [smem:[#allocation0]]
  $region57: #{tpu_custom_call.1} parent=0
    _
  %s7 = ssub.s32 1, %s5
  %s8 = scalar_select 0, %s7, %s5
  $region1: #{tpu_custom_call.1} parent=0
    #allocation2 [shape = 'u8[8192]{0}', space=vmem, size = 0x2000, scoped, tag = 'input window, operand 0']
    #allocation3 [shape = 's32[2]{0}', space=sflag, size = 0x8, scoped, tag = 'scoped memory for tpu_custom_call.1']
    #allocation4 [shape = 's32[2]{0}', space=sflag, size = 0x8, scoped, tag = 'scoped memory for tpu_custom_call.1']
    #allocation5 [shape = 'u8[8192]{0}', space=vmem, size = 0x2000, scoped, tag = 'input window, operand 1']
    #allocation6 [shape = 's32[2]{0}', space=sflag, size = 0x8, scoped, tag = 'scoped memory for tpu_custom_call.1']
    #allocation7 [shape = 'u8[8192]{0}', space=vmem, size = 0x2000, scoped, tag = 'output window, operand 0']
    %9 = vsyncpa [#allocation3], 0
    %s10 = scalar_lea.sflag [#allocation3], 1
    %11 = vsyncpa %s10, 0
    %12 = vsyncpa [#allocation6], 0
    %s13 = scalar_lea.sflag [#allocation6], 1
    %14 = vsyncpa %s13, 0
    %15 = vsyncpa [#allocation4], 0
    %s16 = scalar_lea.sflag [#allocation4], 1
    %17 = vsyncpa %s16, 0
    loop: start=0, step=1, limit=10
    $region2: #{tpu_custom_call.1} parent=1 // loop_pre_header
      _
    $region3: #{tpu_custom_call.1} parent=1 // loop_header
      %s19 = sphi 0, %s23
      %p20 = scmp.ge.s32.totalorder %s19, 10
      %s26 = sphi 0, %s45
      %s27 = sphi 0, %s41
      %s28 = sphi 0, %s37
      %s29 = sphi 0, %s26
      %s30 = sphi 0, %s27
      %s31 = sphi 0, %s28
      %s32 = sphi 0, %s29
      %s33 = sphi 0, %s30
      %s34 = sphi 0, %s31
      %s52 = sphi 0, %s54
      %s55 = sphi 0, %s52
      %s56 = sphi 0, %s55
      %s72 = sphi 0, %s56
      %s80 = sphi 0, %s82
      %s83 = sphi 0, %s80
      %s84 = sphi 0, %s83
      %s100 = sphi 0, %s84
      %s108 = sphi 0, %s110
      %s111 = sphi 0, %s108
      %s112 = sphi 0, %s111
      %s128 = sphi 0, %s112
      %s134 = sphi 0, %s136
      %s137 = sphi 0, %s134
      %s138 = sphi 0, %s137
      %s154 = sphi 0, %s138
      %s164 = sphi 0, %s166
      %s167 = sphi 0, %s164
      %s168 = sphi 0, %s167
      %s184 = sphi 0, %s168
    $region4: #{tpu_custom_call.1} parent=1 // loop_header_branch
      %22 = sbr.rel (%p20) target = $region8
    $region5: #{tpu_custom_call.1} parent=1 // loop_body
      %s24 = ssub.s32 %s19, 1
      %s25 = ssub.s32 %s19, 2
      %s35 = sadd.s32 1, %s28
      %p36 = scmp.ge.s32.totalorder %s35, 1
      %s37 = scalar_select %p36, 0, %s35
      %s38 = sadd.s32 1, %s27
      %s39 = scalar_select %p36, %s38, %s27
      %p40 = scmp.ge.s32.totalorder %s39, 4
      %s41 = scalar_select %p40, 0, %s39
      %s42 = sadd.s32 1, %s26
      %s43 = scalar_select %p40, %s42, %s26
      %p44 = scmp.ge.s32.totalorder %s43, 2
      %s45 = scalar_select %p44, 0, %s43
      %s46 = ssub.s32 %s26, %s45
      %s47 = ssub.s32 %s27, %s41
      %s48 = sor.u32 %s46, %s47
      %s49 = ssub.s32 %s28, %s37
      %s50 = sor.u32 %s48, %s49
      %p51 = scmp.eq.s32.totalorder %s50, 0
      %s53 = sadd.s32 %s52, 1
      %s54 = scalar_select %p51, %s52, %s53
      %p57 = pneg %p51
      %p58 = scmp.eq.s32.totalorder %s19, 7
      %p59 = por %p57, %p58
      %p60 = scmp.ne.s32.totalorder %s52, %s55
      %p61 = scmp.eq.s32.totalorder %s19, 0
      %p62 = por %p60, %p61
      %p63 = scmp.ne.s32.totalorder %s52, %s55
      %p64 = scmp.eq.s32.totalorder %s24, 7
      %p65 = por %p63, %p64
      %p66 = scmp.ne.s32.totalorder %s55, %s56
      %p67 = scmp.eq.s32.totalorder %s24, 0
      %p68 = por %p66, %p67
      %p69 = scmp.ne.s32.totalorder %s55, %s56
      %p70 = scmp.eq.s32.totalorder %s25, 7
      %p71 = por %p69, %p70
      %p73 = scmp.ne.s32.totalorder %s56, %s72
      %p74 = scmp.eq.s32.totalorder %s25, 0
      %p75 = por %p73, %p74
      %s76 = ssub.s32 %s26, %s45
      %s77 = ssub.s32 %s27, %s41
      %s78 = sor.u32 %s76, %s77
      %p79 = scmp.eq.s32.totalorder %s78, 0
      %s81 = sadd.s32 %s80, 1
      %s82 = scalar_select %p79, %s80, %s81
      %p85 = pneg %p79
      %p86 = scmp.eq.s32.totalorder %s19, 7
      %p87 = por %p85, %p86
      %p88 = scmp.ne.s32.totalorder %s80, %s83
      %p89 = scmp.eq.s32.totalorder %s19, 0
      %p90 = por %p88, %p89
      %p91 = scmp.ne.s32.totalorder %s80, %s83
      %p92 = scmp.eq.s32.totalorder %s24, 7
      %p93 = por %p91, %p92
      %p94 = scmp.ne.s32.totalorder %s83, %s84
      %p95 = scmp.eq.s32.totalorder %s24, 0
      %p96 = por %p94, %p95
      %p97 = scmp.ne.s32.totalorder %s83, %s84
      %p98 = scmp.eq.s32.totalorder %s25, 7
      %p99 = por %p97, %p98
      %p101 = scmp.ne.s32.totalorder %s84, %s100
      %p102 = scmp.eq.s32.totalorder %s25, 0
      %p103 = por %p101, %p102
      %s104 = ssub.s32 %s26, %s45
      %s105 = ssub.s32 %s28, %s37
      %s106 = sor.u32 %s104, %s105
      %p107 = scmp.eq.s32.totalorder %s106, 0
      %s109 = sadd.s32 %s108, 1
      %s110 = scalar_select %p107, %s108, %s109
      %p113 = pneg %p107
      %p114 = scmp.eq.s32.totalorder %s19, 7
      %p115 = por %p113, %p114
      %p116 = scmp.ne.s32.totalorder %s108, %s111
      %p117 = scmp.eq.s32.totalorder %s19, 0
      %p118 = por %p116, %p117
      %p119 = scmp.ne.s32.totalorder %s108, %s111
      %p120 = scmp.eq.s32.totalorder %s24, 7
      %p121 = por %p119, %p120
      %p122 = scmp.ne.s32.totalorder %s111, %s112
      %p123 = scmp.eq.s32.totalorder %s24, 0
      %p124 = por %p122, %p123
      %p125 = scmp.ne.s32.totalorder %s111, %s112
      %p126 = scmp.eq.s32.totalorder %s25, 7
      %p127 = por %p125, %p126
      %p129 = scmp.ne.s32.totalorder %s112, %s128
      %p130 = scmp.eq.s32.totalorder %s25, 0
      %p131 = por %p129, %p130
      %s132 = ssub.s32 %s26, %s45
      %p133 = scmp.eq.s32.totalorder %s132, 0
      %s135 = sadd.s32 %s134, 1
      %s136 = scalar_select %p133, %s134, %s135
      %p139 = pneg %p133
      %p140 = scmp.eq.s32.totalorder %s19, 7
      %p141 = por %p139, %p140
      %p142 = scmp.ne.s32.totalorder %s134, %s137
      %p143 = scmp.eq.s32.totalorder %s19, 0
      %p144 = por %p142, %p143
      %p145 = scmp.ne.s32.totalorder %s134, %s137
      %p146 = scmp.eq.s32.totalorder %s24, 7
      %p147 = por %p145, %p146
      %p148 = scmp.ne.s32.totalorder %s137, %s138
      %p149 = scmp.eq.s32.totalorder %s24, 0
      %p150 = por %p148, %p149
      %p151 = scmp.ne.s32.totalorder %s137, %s138
      %p152 = scmp.eq.s32.totalorder %s25, 7
      %p153 = por %p151, %p152
      %p155 = scmp.ne.s32.totalorder %s138, %s154
      %p156 = scmp.eq.s32.totalorder %s25, 0
      %p157 = por %p155, %p156
      %s158 = ssub.s32 %s26, %s45
      %s159 = ssub.s32 %s27, %s41
      %s160 = sor.u32 %s158, %s159
      %s161 = ssub.s32 %s28, %s37
      %s162 = sor.u32 %s160, %s161
      %p163 = scmp.eq.s32.totalorder %s162, 0
      %s165 = sadd.s32 %s164, 1
      %s166 = scalar_select %p163, %s164, %s165
      %p169 = pneg %p163
      %p170 = scmp.eq.s32.totalorder %s19, 7
      %p171 = por %p169, %p170
      %p172 = scmp.ne.s32.totalorder %s164, %s167
      %p173 = scmp.eq.s32.totalorder %s19, 0
      %p174 = por %p172, %p173
      %p175 = scmp.ne.s32.totalorder %s164, %s167
      %p176 = scmp.eq.s32.totalorder %s24, 7
      %p177 = por %p175, %p176
      %p178 = scmp.ne.s32.totalorder %s167, %s168
      %p179 = scmp.eq.s32.totalorder %s24, 0
      %p180 = por %p178, %p179
      %p181 = scmp.ne.s32.totalorder %s167, %s168
      %p182 = scmp.eq.s32.totalorder %s25, 7
      %p183 = por %p181, %p182
      %p185 = scmp.ne.s32.totalorder %s168, %s184
      %p186 = scmp.eq.s32.totalorder %s25, 0
      %p187 = por %p185, %p186
      %p188 = scmp.le.s32.totalorder 1, %s19
      %p189 = scmp.lt.s32.totalorder %s19, 9
      %p190 = pnand %p188, %p189
      %p191 = pneg %p190
      // Predicated region
      $region9: #{tpu_custom_call.1} parent=5 // pred_check
        _
      $region10: #{tpu_custom_call.1} parent=5 // pred_check_branch
        %193 = sbr.rel (%p190) target = $region12
      $region11: #{tpu_custom_call.1} parent=5 // pred_region
        %s194 = ssub.s32 %s19, 1
      $region12: #{tpu_custom_call.1} parent=5 // pred_fallthru
        _
      %p195 = scmp.lt.s32.totalorder %s19, 8
      // Predicated region
      $region13: #{tpu_custom_call.1} parent=5 // pred_check
        %p196 = pneg %p195
      $region14: #{tpu_custom_call.1} parent=5 // pred_check_branch
        %198 = sbr.rel (%p196) target = $region16
      $region15: #{tpu_custom_call.1} parent=5 // pred_region
        // Predicated region
        $region17: #{tpu_custom_call.1} parent=15 // pred_check
          %p199 = pneg %p62
        $region18: #{tpu_custom_call.1} parent=15 // pred_check_branch
          %201 = sbr.rel (%p199) target = $region20
        $region19: #{tpu_custom_call.1} parent=15 // pred_region
          %s202 = sand.u32 %s52, 1
          %s203 = scalar_lea.sflag [#allocation3], %s202
          %s204 = sand.u32 %s52, 1
          %s205 = smul.addr %s204, 8
          %s206 = scalar_lea.vmem [#allocation2], %s205
          %s208 = ssub.s32 128, 128
          %209 = vsyncadd %s203, %s208
          %s210 = sadd.s32 %s28, %s27
          %s211 = smul.addr %s26, 4
          %s212 = sadd.s32 %s210, %s211
          %s213 = smul.addr %s212, 128
          %s214 = scalar_lea.hbm %s0, %s213
          %s216 = sshll.u32 %s206, 4
          %s217 = int_to_ptr.vmem [resolvable:$true] %s216
          %219 = dma.hbm_to_vmem [thread:$0]  %s214, 128, %s217, %s203
        $region20: #{tpu_custom_call.1} parent=15 // pred_fallthru
          _
        // Predicated region
        $region21: #{tpu_custom_call.1} parent=15 // pred_check
          %p220 = pneg %p90
        $region22: #{tpu_custom_call.1} parent=15 // pred_check_branch
          %222 = sbr.rel (%p220) target = $region24
        $region23: #{tpu_custom_call.1} parent=15 // pred_region
          %s223 = sand.u32 %s80, 1
          %s224 = scalar_lea.sflag [#allocation6], %s223
          %s225 = sand.u32 %s80, 1
          %s226 = smul.addr %s225, 8
          %s227 = scalar_lea.vmem [#allocation5], %s226
          %s229 = ssub.s32 128, 128
          %230 = vsyncadd %s224, %s229
          %s231 = smul.addr %s26, 4
          %s232 = sadd.s32 %s27, %s231
          %s233 = smul.addr %s232, 128
          %s234 = scalar_lea.hbm %s1, %s233
          %s236 = sshll.u32 %s227, 4
          %s237 = int_to_ptr.vmem [resolvable:$true] %s236
          %239 = dma.hbm_to_vmem [thread:$0]  %s234, 128, %s237, %s224
        $region24: #{tpu_custom_call.1} parent=15 // pred_fallthru
          _
        // Predicated region
        $region25: #{tpu_custom_call.1} parent=15 // pred_check
          %p240 = pneg %p118
        $region26: #{tpu_custom_call.1} parent=15 // pred_check_branch
          %242 = sbr.rel (%p240) target = $region28
        $region27: #{tpu_custom_call.1} parent=15 // pred_region
          %p243 = scmp.lt.s32.totalorder %s26, 1
          %s244 = scalar_select %p243, %s26, 1
          %p245 = scmp.lt.s32.totalorder %s28, 0
          %s246 = scalar_select %p245, %s28, 0
          %s247 = sadd.s32 %s246, %s244
          %s248 = smul.addr %s247, 8
          %s249 = scalar_lea.vmem %s2, %s248
        $region28: #{tpu_custom_call.1} parent=15 // pred_fallthru
          _
        // Predicated region
        $region29: #{tpu_custom_call.1} parent=15 // pred_check
          %p250 = pneg %p144
        $region30: #{tpu_custom_call.1} parent=15 // pred_check_branch
          %252 = sbr.rel (%p250) target = $region32
        $region31: #{tpu_custom_call.1} parent=15 // pred_region
          %p253 = scmp.lt.s32.totalorder %s26, 1
          %s254 = scalar_select %p253, %s26, 1
          %s255 = scalar_lea.vmem %s3, %s254
        $region32: #{tpu_custom_call.1} parent=15 // pred_fallthru
          _
      $region16: #{tpu_custom_call.1} parent=5 // pred_fallthru
        _
      %p256 = scmp.le.s32.totalorder 1, %s19
      %p257 = scmp.lt.s32.totalorder %s19, 9
      %p258 = pnand %p256, %p257
      %p259 = pneg %p258
      // Predicated region
      $region33: #{tpu_custom_call.1} parent=5 // pred_check
        _
      $region34: #{tpu_custom_call.1} parent=5 // pred_check_branch
        %261 = sbr.rel (%p258) target = $region36
      $region35: #{tpu_custom_call.1} parent=5 // pred_region
        %s262 = ssub.s32 %s19, 1
        %s263 = sand.u32 %s55, 1
        %s264 = scalar_lea.sflag [#allocation3], %s263
        %s265 = sand.u32 %s55, 1
        %s266 = smul.addr %s265, 8
        %s267 = scalar_lea.vmem [#allocation2], %s266
        // Predicated region
        $region37: #{tpu_custom_call.1} parent=35 // pred_check
          %p268 = pneg %p68
        $region38: #{tpu_custom_call.1} parent=35 // pred_check_branch
          %270 = sbr.rel (%p268) target = $region40
        $region39: #{tpu_custom_call.1} parent=35 // pred_region
          %271 = dma.done %s264, 128
        $region40: #{tpu_custom_call.1} parent=35 // pred_fallthru
          _
        %s272 = sand.u32 %s83, 1
        %s273 = scalar_lea.sflag [#allocation6], %s272
        %s274 = sand.u32 %s83, 1
        %s275 = smul.addr %s274, 8
        %s276 = scalar_lea.vmem [#allocation5], %s275
        // Predicated region
        $region41: #{tpu_custom_call.1} parent=35 // pred_check
          %p277 = pneg %p96
        $region42: #{tpu_custom_call.1} parent=35 // pred_check_branch
          %279 = sbr.rel (%p277) target = $region44
        $region43: #{tpu_custom_call.1} parent=35 // pred_region
          %280 = dma.done %s273, 128
        $region44: #{tpu_custom_call.1} parent=35 // pred_fallthru
          _
        %s281 = sand.u32 %s55, 1
        %s282 = scalar_lea.sflag [#allocation3], %s281
        %s283 = sand.u32 %s55, 1
        %s284 = smul.addr %s283, 8
        %s285 = scalar_lea.vmem [#allocation2], %s284
        %p286 = pneg %p68
        %p287 = pneg %p65
        %s288 = sand.u32 %s83, 1
        %s289 = scalar_lea.sflag [#allocation6], %s288
        %s290 = sand.u32 %s83, 1
        %s291 = smul.addr %s290, 8
        %s292 = scalar_lea.vmem [#allocation5], %s291
        %p293 = pneg %p96
        %p294 = pneg %p93
        %p295 = scmp.lt.s32.totalorder %s29, 1
        %s296 = scalar_select %p295, %s29, 1
        %p297 = scmp.lt.s32.totalorder %s31, 0
        %s298 = scalar_select %p297, %s31, 0
        %s299 = sadd.s32 %s298, %s296
        %s300 = smul.addr %s299, 8
        %s301 = scalar_lea.vmem %s2, %s300
        %p302 = pneg %p124
        %p303 = pneg %p121
        %p304 = scmp.lt.s32.totalorder %s29, 1
        %s305 = scalar_select %p304, %s29, 1
        %s306 = scalar_lea.vmem %s3, %s305
        %p307 = pneg %p150
        %p308 = pneg %p147
        %p309 = pneg %p180
        %p310 = pneg %p177
        %s311 = sand.u32 %s167, 1
        %s312 = scalar_lea.sflag [#allocation4], %s311
        %s313 = sand.u32 %s167, 1
        %s314 = smul.addr %s313, 8
        %s315 = scalar_lea.vmem [#allocation7], %s314
        %p316 = scmp.lt.s32.totalorder %s29, 1
        %s317 = scalar_select %p316, %s29, 1
        %p318 = scmp.lt.s32.totalorder %s31, 0
        %s319 = scalar_select %p318, %s31, 0
        %s320 = sadd.s32 %s319, %s317
        %s321 = smul.addr %s320, 8
        %s322 = scalar_lea.vmem %s2, %s321
        %p323 = scmp.lt.s32.totalorder %s29, 1
        %s324 = scalar_select %p323, %s29, 1
        %s325 = scalar_lea.vmem %s3, %s324
        %v327 = vld [vmem:[%s267] sm:$0xff]
        %v328 = vmul.f32 %v327, 0.59460354
        %v329 = vpack.c.bf16 %v328, %v328
        %v330 = vld [vmem:[%s276] sm:$0xff]
        %v331 = vpack.c.bf16 %v330, %v330
        %vm332 = vcmask 64512
        %v334 = vsel %vm332, %v329, 0
        %v337 = vsel %vm332, %v331, 0
        %339 = vmatprep.subr.bf16.mxu0 0
        %340 = vmatpush1.bf16.xpose.msra.mxu0 0
        %341 = vmatprep.subr.bf16.mxu0 0
        %342 = vmatpush1.bf16.xpose.msra.mxu0 0
        %343 = vmatprep.subr.bf16.mxu0 0
        %344 = vmatpush1.bf16.xpose.msra.mxu0 0
        %345 = vmatprep.subr.bf16.mxu0 0
        %346 = vmatpush1.bf16.xpose.msra.mxu0 0
        %347 = vmatprep.subr.bf16.mxu0 0
        %348 = vmatpush1.bf16.xpose.msra.mxu0 0
        %349 = vmatprep.subr.bf16.mxu0 0
        %350 = vmatpush1.bf16.xpose.msra.mxu0 0
        %351 = vmatprep.subr.bf16.mxu0 0
        %352 = vmatpush1.bf16.xpose.msra.mxu0 0
        %353 = vmatprep.subr.bf16.mxu0 0
        %354 = vmatpush1.bf16.xpose.msra.mxu0 %v337
        %355 = vmatprep.subr.bf16.mxu0 0
        %356 = vmatpush2.bf16.xpose.msra.mxu0 0
        %357 = vmatprep.subr.bf16.mxu0 0
        %358 = vmatpush2.bf16.xpose.msra.mxu0 0
        %359 = vmatprep.subr.bf16.mxu0 0
        %360 = vmatpush2.bf16.xpose.msra.mxu0 0
        %361 = vmatprep.subr.bf16.mxu0 0
        %362 = vmatpush2.bf16.xpose.msra.mxu0 0
        %363 = vmatprep.subr.bf16.mxu0 0
        %364 = vmatpush2.bf16.xpose.msra.mxu0 0
        %365 = vmatprep.subr.bf16.mxu0 0
        %366 = vmatpush2.bf16.xpose.msra.mxu0 0
        %367 = vmatprep.subr.bf16.mxu0 0
        %368 = vmatpush2.bf16.xpose.msra.mxu0 0
        %369 = vmatprep.subr.bf16.mxu0 0
        %370 = vmatpush2.bf16.xpose.msra.mxu0 0
        %371 = vmatprep.mubr.bf16.mxu0 0
        %372 = vmatmul.mubr.bf16.gmra.mxu0 %v334
        %v373 = vpop.f32.mrf.mxu0
        %v374 = vadd.f32 0.0, %v373
        %v375 = vpop.f32.mrf.mxu0
        %v376 = vpop.f32.mrf.mxu0
        %v377 = vpop.f32.mrf.mxu0
        %378 = vdwg.mxu0
        %v379 = vld [vmem:[%s322] sm:$0xff]
        %v380 = vld [vmem:[%s325] sm:$0x1]
        %382 = vset.pattern.permute.xlu0 0
        %383 = vperm.xlu0 %382, %v379
        %v384 = vpop.permute.xlu0 %383
        %v387 = vlaneseq
        %v388 = vshrl.u32 %v387, 7
        %v389 = vsub.s32 0, %v388
        %v390 = vrot.slane %v380, %v389
        %v392 = vmul.f32 %v384, %v390
        %vm393 = vcmp.ne.f32.partialorder %v392, 0.0
        %v394 = vsel %vm393, %v374, -10000000.0
        %v395 = vsel %vm332, %v394, -inf
        %396 = vmax.xlane.f32.xlu0 %v395
        %v397 = vpop.xlane.xlu0 %396
        %v398 = vsub.f32 %v394, %v397
        %v399 = vmul.f32 %v398, 1.442695
        %v400 = vpow.pop %v399
        %v401 = vsel %vm332, %v400, 0.0
        %402 = vadd.xlane.f32.xlu0 %v401
        %v403 = vpop.xlane.xlu0 %402
        %v404 = vpack.c.bf16 %v400, %v400
        %v406 = vsel %vm332, %v404, 0
        %vm408 = vcmask 1043456
        %v409 = vsel %vm408, %v331, 0
        %411 = vmatprep.subr.bf16.mxu0 0
        %412 = vmatpush1.bf16.msra.mxu0 0
        %413 = vmatprep.subr.bf16.mxu0 0
        %414 = vmatpush1.bf16.msra.mxu0 0
        %415 = vmatprep.subr.bf16.mxu0 0
        %416 = vmatpush1.bf16.msra.mxu0 0
        %417 = vmatprep.subr.bf16.mxu0 0
        %418 = vmatpush1.bf16.msra.mxu0 0
        %419 = vmatprep.subr.bf16.mxu0 0
        %420 = vmatpush1.bf16.msra.mxu0 0
        %421 = vmatprep.subr.bf16.mxu0 0
        %422 = vmatpush1.bf16.msra.mxu0 0
        %423 = vmatprep.subr.bf16.mxu0 0
        %424 = vmatpush1.bf16.msra.mxu0 0
        %425 = vmatprep.subr.bf16.mxu0 0
        %426 = vmatpush1.bf16.msra.mxu0 %v409
        %427 = vmatprep.subr.bf16.mxu0 0
        %428 = vmatpush2.bf16.msra.mxu0 0
        %429 = vmatprep.subr.bf16.mxu0 0
        %430 = vmatpush2.bf16.msra.mxu0 0
        %431 = vmatprep.subr.bf16.mxu0 0
        %432 = vmatpush2.bf16.msra.mxu0 0
        %433 = vmatprep.subr.bf16.mxu0 0
        %434 = vmatpush2.bf16.msra.mxu0 0
        %435 = vmatprep.subr.bf16.mxu0 0
        %436 = vmatpush2.bf16.msra.mxu0 0
        %437 = vmatprep.subr.bf16.mxu0 0
        %438 = vmatpush2.bf16.msra.mxu0 0
        %439 = vmatprep.subr.bf16.mxu0 0
        %440 = vmatpush2.bf16.msra.mxu0 0
        %441 = vmatprep.subr.bf16.mxu0 0
        %442 = vmatpush2.bf16.msra.mxu0 0
        %443 = vmatprep.mubr.bf16.mxu0 0
        %444 = vmatmul.mubr.bf16.gmra.mxu0 %v406
        %v445 = vpop.f32.mrf.mxu0
        %v446 = vadd.f32 0.0, %v445
        %v447 = vpop.f32.mrf.mxu0
        %v448 = vpop.f32.mrf.mxu0
        %v449 = vpop.f32.mrf.mxu0
        %450 = vdwg.mxu0
        %v451 = vrcp.pop %v403
        %v452 = vmul.f32 %v446, %v451
        %453 = vst.msk [vmem:[%s315] sm:$0xff] %vm332, %v452
        %s454 = sand.u32 %s167, 1
        %s455 = scalar_lea.sflag [#allocation4], %s454
        %s456 = sand.u32 %s167, 1
        %s457 = smul.addr %s456, 8
        %s458 = scalar_lea.vmem [#allocation7], %s457
        // Predicated region
        $region45: #{tpu_custom_call.1} parent=35 // pred_check
          %p459 = pneg %p177
        $region46: #{tpu_custom_call.1} parent=35 // pred_check_branch
          %461 = sbr.rel (%p459) target = $region48
        $region47: #{tpu_custom_call.1} parent=35 // pred_region
          %s463 = ssub.s32 128, 128
          %464 = vsyncadd %s455, %s463
          %s465 = sadd.s32 %s31, %s30
          %s466 = smul.addr %s29, 4
          %s467 = sadd.s32 %s465, %s466
          %s468 = smul.addr %s467, 128
          %s469 = scalar_lea.hbm %s4, %s468
          %s471 = sshll.u32 %s458, 4
          %s472 = int_to_ptr.vmem [resolvable:$true] %s471
          %474 = dma.vmem_to_hbm [thread:$0]  %s472, 128, %s469, %s455
        $region48: #{tpu_custom_call.1} parent=35 // pred_fallthru
          _
      $region36: #{tpu_custom_call.1} parent=5 // pred_fallthru
        _
      %p475 = scmp.le.s32.totalorder 2, %s19
      // Predicated region
      $region49: #{tpu_custom_call.1} parent=5 // pred_check
        %p476 = pneg %p475
      $region50: #{tpu_custom_call.1} parent=5 // pred_check_branch
        %478 = sbr.rel (%p476) target = $region52
      $region51: #{tpu_custom_call.1} parent=5 // pred_region
        %s479 = ssub.s32 %s19, 2
        // Predicated region
        $region53: #{tpu_custom_call.1} parent=51 // pred_check
          %p480 = pneg %p183
        $region54: #{tpu_custom_call.1} parent=51 // pred_check_branch
          %482 = sbr.rel (%p480) target = $region56
        $region55: #{tpu_custom_call.1} parent=51 // pred_region
          %s483 = sand.u32 %s168, 1
          %s484 = scalar_lea.sflag [#allocation4], %s483
          %s485 = sand.u32 %s168, 1
          %s486 = smul.addr %s485, 8
          %s487 = scalar_lea.vmem [#allocation7], %s486
          %488 = dma.done %s484, 128
        $region56: #{tpu_custom_call.1} parent=51 // pred_fallthru
          _
      $region52: #{tpu_custom_call.1} parent=5 // pred_fallthru
        _
    $region6: #{tpu_custom_call.1} parent=1 // loop_footer
      %s23 = sadd.s32 1, %s19
    $region7: #{tpu_custom_call.1} parent=1 // loop_footer_branch
      %18 = sbr.rel target = $region3
    $region8: #{tpu_custom_call.1} parent=1 // loop_exit
      _
    %489 = vsyncpa [#allocation3], 1
    %s490 = scalar_lea.sflag [#allocation3], 1
    %491 = vsyncpa %s490, 1
    %492 = vsyncpa [#allocation6], 1
    %s493 = scalar_lea.sflag [#allocation6], 1
    %494 = vsyncpa %s493, 1
    %495 = vsyncpa [#allocation4], 1
    %s496 = scalar_lea.sflag [#allocation4], 1
    %497 = vsyncpa %s496, 1

</llo_original>
